<compile_context>
chip_gen: v5e
topology: v5e:2x2
jax: 0.10.0
libtpu: 0.0.40
codegen_flags: <defaults>
</compile_context>

<pallas_src>
import math

import jax
import jax.numpy as jnp
from jax import lax
from jax.experimental import pallas as pl
from jax.experimental.pallas import tpu as pltpu

_EPS = 1e-5
# Safe on v5e/v6e/v7x; re-derive (and shrink strips / cast to bf16) for large
# production tiles, especially on v7x's 64 MiB VMEM.
_VMEM_LIMIT_BYTES = 32 * 1024 * 1024


def _compiler_params(semantics):
    return pltpu.CompilerParams(dimension_semantics=semantics,
                                vmem_limit_bytes=_VMEM_LIMIT_BYTES)


def _pick_divisor(n, cap):
    divs = [d for d in range(1, n + 1) if n % d == 0 and d <= cap]
    mult8 = [d for d in divs if d % 8 == 0]
    return max(mult8) if mult8 else max(divs)


# ------------------------------------------------------------------
# Stage 1: 1x1 conv (bottleneck) + per-block BN1 partial statistics.
# ------------------------------------------------------------------
def _conv1x1_stats_kernel(x_ref, w_ref, z_ref, ps_ref, pss_ref):
    # x_ref: (TM, Cin), w_ref: (Cin, Cmid)
    z = jnp.dot(x_ref[...], w_ref[...], preferred_element_type=jnp.float32)
    z_ref[...] = z.astype(z_ref.dtype)
    ps_ref[...] = jnp.sum(z, axis=0).reshape(1, 1, -1)
    pss_ref[...] = jnp.sum(z * z, axis=0).reshape(1, 1, -1)


def _conv1x1(x_flat, w_io, row_tile, out_dtype):
    M, Cin = x_flat.shape
    Cmid = w_io.shape[-1]
    T = M // row_tile
    return pl.pallas_call(
        _conv1x1_stats_kernel,
        out_shape=(jax.ShapeDtypeStruct((M, Cmid), out_dtype),
                   jax.ShapeDtypeStruct((T, 1, Cmid), jnp.float32),
                   jax.ShapeDtypeStruct((T, 1, Cmid), jnp.float32)),
        grid=(T,),
        in_specs=[pl.BlockSpec((row_tile, Cin), lambda i: (i, 0)),
                  pl.BlockSpec((Cin, Cmid), lambda i: (0, 0))],
        out_specs=(pl.BlockSpec((row_tile, Cmid), lambda i: (i, 0)),
                   pl.BlockSpec((1, 1, Cmid), lambda i: (i, 0, 0)),
                   pl.BlockSpec((1, 1, Cmid), lambda i: (i, 0, 0))),
        compiler_params=_compiler_params(("parallel",)),
    )(x_flat, w_io)


# ------------------------------------------------------------------
# Stage 2: fused BN1-affine + ReLU + 3x3 conv (stride 1, pad 1) (+ shortcut)
#          + per-block BN2 partial statistics.  Strip tiling over H with 1-row halos.
# ------------------------------------------------------------------
def _conv3x3_accumulate(z_ref, top_ref, bot_ref, w_ref, sc1_ref, sh1_ref, acc_ref):
    S, W, Cmid = z_ref.shape[1], z_ref.shape[2], z_ref.shape[3]
    t = pl.program_id(1)
    n_strips = pl.num_programs(1)

    scale = sc1_ref[0]          # (Cmid,)
    shift = sh1_ref[0]

    def bn_relu(v):
        return jnp.maximum(v * scale + shift, 0.0)

    center = bn_relu(z_ref[0])                                      # (S, W, Cmid)
    top = jnp.where(t == 0, 0.0, bn_relu(top_ref[0]))               # (1, W, Cmid)
    bot = jnp.where(t == n_strips - 1, 0.0, bn_relu(bot_ref[0]))    # (1, W, Cmid)

    a = jnp.concatenate([top, center, bot], axis=0).astype(w_ref.dtype)  # (S+2, W, Cmid)

    # Column-shifted, zero-filled copies built once; the dy taps then become
    # sublane-aligned row-offset slices of the flattened activation.
    zcol = jnp.zeros((S + 2, 1, Cmid), a.dtype)
    shifted = (
        jnp.concatenate([zcol, a[:, :W - 1, :]], axis=1),    # a[., x-1]
        a,                                                   # a[., x  ]
        jnp.concatenate([a[:, 1:, :], zcol], axis=1),        # a[., x+1]
    )

    acc_ref[...] = jnp.zeros_like(acc_ref)
    for dx in range(3):
        a_flat = shifted[dx].reshape((S + 2) * W, Cmid)
        for dy in range(3):
            acc_ref[...] += jnp.dot(a_flat[dy * W:dy * W + S * W, :],
                                    w_ref[dy, dx],
                                    preferred_element_type=jnp.float32)
    return acc_ref[...]                                       # (S*W, Cout) f32


def _emit_conv_outputs(x2_flat, o_ref, ps_ref, pss_ref):
    S, W, Cout = o_ref.shape[1], o_ref.shape[2], o_ref.shape[3]
    o_ref[...] = x2_flat.reshape(1, S, W, Cout).astype(o_ref.dtype)
    ps_ref[...] = jnp.sum(x2_flat, axis=0).reshape(1, 1, 1, Cout)
    pss_ref[...] = jnp.sum(x2_flat * x2_flat, axis=0).reshape(1, 1, 1, Cout)


def _conv3x3_kernel(z_ref, top_ref, bot_ref, w_ref, sc1_ref, sh1_ref,
                    o_ref, ps_ref, pss_ref, acc_ref):
    x2 = _conv3x3_accumulate(z_ref, top_ref, bot_ref, w_ref, sc1_ref, sh1_ref, acc_ref)
    _emit_conv_outputs(x2, o_ref, ps_ref, pss_ref)


def _conv3x3_shortcut_kernel(z_ref, top_ref, bot_ref, w_ref, sc1_ref, sh1_ref, s_ref,
                             o_ref, ps_ref, pss_ref, acc_ref):
    x2 = _conv3x3_accumulate(z_ref, top_ref, bot_ref, w_ref, sc1_ref, sh1_ref, acc_ref)
    S, W, Cout = s_ref.shape[1], s_ref.shape[2], s_ref.shape[3]
    x2 = x2 + s_ref[0].reshape(S * W, Cout).astype(jnp.float32)
    _emit_conv_outputs(x2, o_ref, ps_ref, pss_ref)


def _conv3x3(z1, w_hwio, scale1, shift1, shortcut, strip_rows):
    N, H, W, Cmid = z1.shape
    Cout = w_hwio.shape[-1]
    S = strip_rows
    T = H // S

    in_specs = [
        pl.BlockSpec((1, S, W, Cmid), lambda n, t: (n, t, 0, 0)),
        pl.BlockSpec((1, 1, W, Cmid),
                     lambda n, t: (n, jnp.maximum(t * S - 1, 0), 0, 0)),
        pl.BlockSpec((1, 1, W, Cmid),
                     lambda n, t: (n, jnp.minimum(t * S + S, H - 1), 0, 0)),
        pl.BlockSpec((3, 3, Cmid, Cout), lambda n, t: (0, 0, 0, 0)),
        pl.BlockSpec((1, Cmid), lambda n, t: (0, 0)),
        pl.BlockSpec((1, Cmid), lambda n, t: (0, 0)),
    ]
    args = [z1, z1, z1, w_hwio, scale1, shift1]
    kernel = _conv3x3_kernel
    if shortcut is not None:
        in_specs.append(pl.BlockSpec((1, S, W, Cout), lambda n, t: (n, t, 0, 0)))
        args.append(shortcut)
        kernel = _conv3x3_shortcut_kernel

    return pl.pallas_call(
        kernel,
        out_shape=(jax.ShapeDtypeStruct((N, H, W, Cout), jnp.float32),
                   jax.ShapeDtypeStruct((N, T, 1, Cout), jnp.float32),
                   jax.ShapeDtypeStruct((N, T, 1, Cout), jnp.float32)),
        grid=(N, T),
        in_specs=in_specs,
        out_specs=(pl.BlockSpec((1, S, W, Cout), lambda n, t: (n, t, 0, 0)),
                   pl.BlockSpec((1, 1, 1, Cout), lambda n, t: (n, t, 0, 0)),
                   pl.BlockSpec((1, 1, 1, Cout), lambda n, t: (n, t, 0, 0))),
        scratch_shapes=[pltpu.VMEM((S * W, Cout), jnp.float32)],
        compiler_params=_compiler_params(("parallel", "parallel")),
    )(*args)


# ------------------------------------------------------------------
# Stage 3: BN2 + ReLU elementwise sweep (tiled over N*H*W rows).
# ------------------------------------------------------------------
def _bn_relu_kernel(x_ref, sc_ref, sh_ref, y_ref):
    y_ref[...] = jnp.maximum(x_ref[...] * sc_ref[...] + sh_ref[...],
                             0.0).astype(y_ref.dtype)


def _bn_relu(x_flat, scale, shift, row_tile):
    M, C = x_flat.shape
    T = M // row_tile
    return pl.pallas_call(
        _bn_relu_kernel,
        out_shape=jax.ShapeDtypeStruct((M, C), jnp.float32),
        grid=(T,),
        in_specs=[pl.BlockSpec((row_tile, C), lambda i: (i, 0)),
                  pl.BlockSpec((1, C), lambda i: (0, 0)),
                  pl.BlockSpec((1, C), lambda i: (0, 0))],
        out_specs=pl.BlockSpec((row_tile, C), lambda i: (i, 0)),
        compiler_params=_compiler_params(("parallel",)),
    )(x_flat, scale, shift)


# ------------------------------------------------------------------
# Tiny per-channel reductions (C-sized arrays; plain jnp, negligible cost).
# ------------------------------------------------------------------
def _bn_scale_shift(psum, psumsq, count, gamma, beta, eps=_EPS):
    c = psum.shape[-1]
    total = jnp.sum(psum.reshape(-1, c), axis=0)
    total_sq = jnp.sum(psumsq.reshape(-1, c), axis=0)
    mean = total / count
    var = jnp.maximum(total_sq / count - mean * mean, 0.0)  # biased var (BN training)
    inv = lax.rsqrt(var + eps)
    scale = gamma.astype(jnp.float32) * inv
    shift = beta.astype(jnp.float32) - mean * scale
    return scale.reshape(1, c), shift.reshape(1, c)


# ------------------------------------------------------------------
# Module forward: NHWC-native, plus a PyTorch-layout (NCHW) wrapper.
# ------------------------------------------------------------------
def bottleneck_forward_nhwc(x_nhwc, w1_io, w2_hwio, gamma1, beta1, gamma2, beta2,
                            shortcut_nhwc=None, *, strip_rows=None, row_tile=None,
                            compute_dtype=jnp.float32):
    N, H, W, Cin = x_nhwc.shape
    Cout = w2_hwio.shape[-1]
    M = N * H * W

    S = strip_rows if strip_rows is not None else _pick_divisor(H, 32)
    TM = row_tile if row_tile is not None else _pick_divisor(M, 2048)
    if H % S != 0:
        raise ValueError("strip_rows must divide H")
    if M % TM != 0:
        raise ValueError("row_tile must divide N*H*W")

    # Bottleneck 1x1 conv + BN1 partial statistics.
    z1_flat, ps1, pss1 = _conv1x1(
        x_nhwc.reshape(M, Cin).astype(compute_dtype),
        w1_io.astype(compute_dtype), TM, compute_dtype)
    scale1, shift1 = _bn_scale_shift(ps1, pss1, M, gamma1, beta1)

    # Fused BN1+ReLU -> 3x3 conv (+ shortcut) + BN2 partial statistics.
    z1 = z1_flat.reshape(N, H, W, -1)
    x2, ps2, pss2 = _conv3x3(z1, w2_hwio.astype(compute_dtype),
                             scale1, shift1, shortcut_nhwc, S)
    scale2, shift2 = _bn_scale_shift(ps2, pss2, M, gamma2, beta2)

    # BN2 + ReLU elementwise sweep.
    y = _bn_relu(x2.reshape(M, Cout), scale2, shift2, TM).reshape(N, H, W, Cout)

    # TODO(synk): BatchNorm running_mean/running_var momentum updates (training
    # side-effect with no output dependence) are not represented here.
    return x2, y


def bottleneck_forward_nchw(x_nchw, w1_oihw, w2_oihw, gamma1, beta1, gamma2, beta2,
                            shortcut_nchw=None, **kwargs):
    """PyTorch-layout compatibility wrapper: one transpose per tensor at the module
    boundary; all kernels run NHWC (channels on lanes) internally."""
    x = jnp.transpose(x_nchw, (0, 2, 3, 1))
    w1 = jnp.transpose(w1_oihw[:, :, 0, 0], (1, 0))          # (O,I,1,1) -> (I,O)
    w2 = jnp.transpose(w2_oihw, (2, 3, 1, 0))                # OIHW -> HWIO
    s = (jnp.transpose(shortcut_nchw, (0, 2, 3, 1))
         if shortcut_nchw is not None else None)
    x2, y = bottleneck_forward_nhwc(x, w1, w2, gamma1, beta1, gamma2, beta2, s, **kwargs)
    return jnp.transpose(x2, (0, 3, 1, 2)), jnp.transpose(y, (0, 3, 1, 2))


# ------------------------------------------------------------------
# Parameter init (MSRInitializer: Alpha=0 since Activation=True, WeightScale=1).
# ------------------------------------------------------------------
def msr_init_conv_weight(key, cout, cin, k, alpha=0.0, weight_scale=1.0):
    fan_out = cout * k * k                        # PyTorch fan_out for OIHW conv weight
    gain = math.sqrt(2.0 / (1.0 + alpha ** 2))    # calculate_gain('leaky_relu', alpha)
    std = gain / math.sqrt(fan_out)
    bound = math.sqrt(3.0) * std * weight_scale
    if weight_scale == 0:
        return jnp.zeros((cout, cin, k, k), jnp.float32)
    return jax.random.uniform(key, (cout, cin, k, k), jnp.float32,
                              minval=-bound, maxval=bound)


if __name__ == "__main__":
    key = jax.random.PRNGKey(0)
    k_x, k_w1, k_w2, k_s = jax.random.split(key, 4)

    # BottleneckConvolutionalLayer(InputChannels=4, OutputChannels=8)
    N, Cin, Cout, H, W = 2, 4, 8, 16, 16
    x = jax.random.normal(k_x, (N, Cin, H, W), jnp.float32)
    shortcut = jax.random.normal(k_s, (N, Cout, H, W), jnp.float32)

    w1 = msr_init_conv_weight(k_w1, Cout, Cin, 1)     # bottleneck 1x1 conv
    w2 = msr_init_conv_weight(k_w2, Cout, Cout, 3)    # transformation 3x3 conv
    gamma1 = jnp.ones((Cout,), jnp.float32)
    beta1 = jnp.zeros((Cout,), jnp.float32)
    gamma2 = jnp.ones((Cout,), jnp.float32)
    beta2 = jnp.zeros((Cout,), jnp.float32)

    def reference(x_nchw, shortcut_nchw):
        dn = ("NCHW", "OIHW", "NCHW")
        z1 = lax.conv_general_dilated(x_nchw, w1, (1, 1), ((0, 0), (0, 0)),
                                      dimension_numbers=dn)
        m1 = z1.mean(axis=(0, 2, 3), keepdims=True)
        v1 = z1.var(axis=(0, 2, 3), keepdims=True)
        a1 = jnp.maximum((z1 - m1) / jnp.sqrt(v1 + _EPS)
                         * gamma1.reshape(1, -1, 1, 1) + beta1.reshape(1, -1, 1, 1), 0.0)
        x2 = lax.conv_general_dilated(a1, w2, (1, 1), ((1, 1), (1, 1)),
                                      dimension_numbers=dn)
        if shortcut_nchw is not None:
            x2 = x2 + shortcut_nchw
        m2 = x2.mean(axis=(0, 2, 3), keepdims=True)
        v2 = x2.var(axis=(0, 2, 3), keepdims=True)
        y = jnp.maximum((x2 - m2) / jnp.sqrt(v2 + _EPS)
                        * gamma2.reshape(1, -1, 1, 1) + beta2.reshape(1, -1, 1, 1), 0.0)
        return x2, y

    for sc in (None, shortcut):
        x_out, y_out = bottleneck_forward_nchw(
            x, w1, w2, gamma1, beta1, gamma2, beta2, shortcut_nchw=sc,
            strip_rows=8, row_tile=128)
        x_out, y_out = jax.block_until_ready((x_out, y_out))

        x_ref, y_ref = reference(x, sc)
        assert jnp.allclose(x_out, x_ref, atol=1e-3, rtol=1e-3), (
            "conv output mismatch (shortcut=%s): max abs err %e"
            % (sc is not None, float(jnp.max(jnp.abs(x_out - x_ref)))))
        assert jnp.allclose(y_out, y_ref, atol=1e-3, rtol=1e-3), (
            "bn/relu output mismatch (shortcut=%s): max abs err %e"
            % (sc is not None, float(jnp.max(jnp.abs(y_out - y_ref)))))

    print("KERNEL_OK")
</pallas_src>

<mosaic_0001>
module attributes {stable_mosaic.version = 11 : i64} {
  func.func @_conv1x1_stats_kernel(%arg0: i32, %arg1: memref<128x4xf32, #tpu.memory_space<vmem>>, %arg2: memref<4x8xf32, #tpu.memory_space<vmem>>, %arg3: memref<128x8xf32, #tpu.memory_space<vmem>>, %arg4: memref<1x1x8xf32, #tpu.memory_space<vmem>>, %arg5: memref<1x1x8xf32, #tpu.memory_space<vmem>>) attributes {dimension_semantics = [#tpu.dimension_semantics<parallel>], iteration_bounds = array<i64: 4>, scalar_prefetch = 0 : i64, scratch_operands = 0 : i64, tpu.core_type = #tpu.core_type<tc>, window_params = [{transform_indices = @transform_0, window_bounds = array<i64: 128, 4>}, {pipeline_mode = #tpu.pipeline_mode<synchronous>, transform_indices = @transform_1, window_bounds = array<i64: 4, 8>}, {transform_indices = @transform_2, window_bounds = array<i64: 128, 8>}, {transform_indices = @transform_3, window_bounds = array<i64: 1, 1, 8>}, {transform_indices = @transform_4, window_bounds = array<i64: 1, 1, 8>}]} {
    %c0 = arith.constant 0 : index
    %c0_0 = arith.constant 0 : index
    %0 = vector.load %arg1[%c0, %c0_0] : memref<128x4xf32, #tpu.memory_space<vmem>>, vector<128x4xf32>
    %c0_1 = arith.constant 0 : index
    %c0_2 = arith.constant 0 : index
    %1 = vector.load %arg2[%c0_1, %c0_2] : memref<4x8xf32, #tpu.memory_space<vmem>>, vector<4x8xf32>
    %cst = arith.constant dense<0.000000e+00> : vector<128x8xf32>
    %2 = tpu.matmul %0, %1, %cst {dimension_numbers = #tpu.dot_dimension_numbers<[1], [0], [0], [1], [0, 0, 1, 1], [], []>} : vector<128x4xf32>, vector<4x8xf32>, vector<128x8xf32> -> vector<128x8xf32>
    %c0_3 = arith.constant 0 : index
    %c0_4 = arith.constant 0 : index
    %3 = vector.load %arg3[%c0_3, %c0_4] : memref<128x8xf32, #tpu.memory_space<vmem>>, vector<128x8xf32>
    tpu.vector_store %arg3[%c0_3, %c0_4], %2 {strides = array<i32>} : memref<128x8xf32, #tpu.memory_space<vmem>>, vector<128x8xf32>,
    %cst_5 = arith.constant dense<0.000000e+00> : vector<8xf32>
    %4 = vector.multi_reduction <add>, %2, %cst_5 [0] : vector<128x8xf32> to vector<8xf32>
    %5 = vector.shape_cast %4 : vector<8xf32> to vector<1x1x8xf32>
    %c0_6 = arith.constant 0 : index
    %c0_7 = arith.constant 0 : index
    %c0_8 = arith.constant 0 : index
    %6 = vector.load %arg4[%c0_6, %c0_7, %c0_8] : memref<1x1x8xf32, #tpu.memory_space<vmem>>, vector<1x1x8xf32>
    tpu.vector_store %arg4[%c0_6, %c0_7, %c0_8], %5 {strides = array<i32>} : memref<1x1x8xf32, #tpu.memory_space<vmem>>, vector<1x1x8xf32>,
    %7 = arith.mulf %2, %2 : vector<128x8xf32>
    %cst_9 = arith.constant dense<0.000000e+00> : vector<8xf32>
    %8 = vector.multi_reduction <add>, %7, %cst_9 [0] : vector<128x8xf32> to vector<8xf32>
    %9 = vector.shape_cast %8 : vector<8xf32> to vector<1x1x8xf32>
    %c0_10 = arith.constant 0 : index
    %c0_11 = arith.constant 0 : index
    %c0_12 = arith.constant 0 : index
    %10 = vector.load %arg5[%c0_10, %c0_11, %c0_12] : memref<1x1x8xf32, #tpu.memory_space<vmem>>, vector<1x1x8xf32>
    tpu.vector_store %arg5[%c0_10, %c0_11, %c0_12], %9 {strides = array<i32>} : memref<1x1x8xf32, #tpu.memory_space<vmem>>, vector<1x1x8xf32>,
    return
  }
  func.func @transform_0(%arg0: i32) -> (i32, i32) {
    %c0_i32 = arith.constant 0 : i32
    %c0_i32_0 = arith.constant 0 : i32
    return %arg0, %c0_i32 : i32, i32
  }
  func.func @transform_1(%arg0: i32) -> (i32, i32) {
    %c0_i32 = arith.constant 0 : i32
    %c0_i32_0 = arith.constant 0 : i32
    %c0_i32_1 = arith.constant 0 : i32
    return %c0_i32, %c0_i32_0 : i32, i32
  }
  func.func @transform_2(%arg0: i32) -> (i32, i32) {
    %c0_i32 = arith.constant 0 : i32
    %c0_i32_0 = arith.constant 0 : i32
    return %arg0, %c0_i32 : i32, i32
  }
  func.func @transform_3(%arg0: i32) -> (i32, i32, i32) {
    %c0_i32 = arith.constant 0 : i32
    %c0_i32_0 = arith.constant 0 : i32
    %c0_i32_1 = arith.constant 0 : i32
    return %arg0, %c0_i32, %c0_i32_0 : i32, i32, i32
  }
  func.func @transform_4(%arg0: i32) -> (i32, i32, i32) {
    %c0_i32 = arith.constant 0 : i32
    %c0_i32_0 = arith.constant 0 : i32
    %c0_i32_1 = arith.constant 0 : i32
    return %arg0, %c0_i32, %c0_i32_0 : i32, i32, i32
  }
}

</mosaic_0001>

<llo_original>
// kernel: tpu_custom_call.1
$region0: #{tpu_custom_call.1}
  #allocation0 [shape = 'u32[]', space=smem, size = 0x4, offset = 0x4, fixed_abs, tag = 'smem constant byte address 0x4 - core index']
  #allocation1 [shape = 'u32[72,128]{1,0:T(1,128)}', space=vmem, size = 0x9000, scoped, tag = 'internal scratch']
  %s0 = inlined_call_operand.vmem [shape: f32[512,4], index: 0, kind: input, shape index: {}]
  %s1 = inlined_call_operand.vmem [shape: f32[4,8], index: 1, kind: input, shape index: {}]
  %s2 = inlined_call_operand.vmem [shape: f32[512,8], index: 2, kind: output, shape index: {0}]
  %s3 = inlined_call_operand.hbm [shape: f32[4,1,8], index: 3, kind: output, shape index: {1}]
  %s4 = inlined_call_operand.hbm [shape: f32[4,1,8], index: 4, kind: output, shape index: {2}]
  %5 = xla_tuple %s2, %s3, %s4
  %s6 = sld [smem:[#allocation0]]
  $region57: #{tpu_custom_call.1} parent=0
    _
  %s8 = ssub.s32 1, %s6
  %s9 = scalar_select 0, %s8, %s6
  $region1: #{tpu_custom_call.1} parent=0
    #allocation2 [shape = 'u8[1024]{0}', space=vmem, size = 0x400, scoped, tag = 'output window, operand 1']
    #allocation3 [shape = 's32[2]{0}', space=sflag, size = 0x8, scoped, tag = 'scoped memory for tpu_custom_call.1']
    #allocation4 [shape = 'u8[1024]{0}', space=vmem, size = 0x400, scoped, tag = 'output window, operand 2']
    #allocation5 [shape = 's32[2]{0}', space=sflag, size = 0x8, scoped, tag = 'scoped memory for tpu_custom_call.1']
    %10 = vsyncpa [#allocation3], 0
    %s11 = scalar_lea.sflag [#allocation3], 1
    %12 = vsyncpa %s11, 0
    %13 = vsyncpa [#allocation5], 0
    %s14 = scalar_lea.sflag [#allocation5], 1
    %15 = vsyncpa %s14, 0
    loop: start=0, step=1, limit=6
    $region2: #{tpu_custom_call.1} parent=1 // loop_pre_header
      _
    $region3: #{tpu_custom_call.1} parent=1 // loop_header
      %s17 = sphi 0, %s21
      %p18 = scmp.ge.s32.totalorder %s17, 6
      %s27 = sphi 0, %s29
      %s30 = sphi 0, %s27
      %s31 = sphi 0, %s30
      %s47 = sphi 0, %s31
      %s51 = sphi 0, %s51
      %s53 = sphi 0, %s51
      %s54 = sphi 0, %s53
      %s68 = sphi 0, %s54
      %s74 = sphi 0, %s76
      %s77 = sphi 0, %s74
      %s78 = sphi 0, %s77
      %s94 = sphi 0, %s78
      %s100 = sphi 0, %s102
      %s103 = sphi 0, %s100
      %s104 = sphi 0, %s103
      %s120 = sphi 0, %s104
      %s126 = sphi 0, %s128
      %s129 = sphi 0, %s126
      %s130 = sphi 0, %s129
      %s146 = sphi 0, %s130
    $region4: #{tpu_custom_call.1} parent=1 // loop_header_branch
      %20 = sbr.rel (%p18) target = $region8
    $region5: #{tpu_custom_call.1} parent=1 // loop_body
      %s22 = ssub.s32 %s17, 1
      %s23 = ssub.s32 %s17, 2
      %s24 = sadd.s32 %s17, 1
      %s25 = ssub.s32 %s17, %s24
      %p26 = scmp.eq.s32.totalorder %s25, 0
      %s28 = sadd.s32 %s27, 1
      %s29 = scalar_select %p26, %s27, %s28
      %p32 = pneg %p26
      %p33 = scmp.eq.s32.totalorder %s17, 3
      %p34 = por %p32, %p33
      %p35 = scmp.ne.s32.totalorder %s27, %s30
      %p36 = scmp.eq.s32.totalorder %s17, 0
      %p37 = por %p35, %p36
      %p38 = scmp.ne.s32.totalorder %s27, %s30
      %p39 = scmp.eq.s32.totalorder %s22, 3
      %p40 = por %p38, %p39
      %p41 = scmp.ne.s32.totalorder %s30, %s31
      %p42 = scmp.eq.s32.totalorder %s22, 0
      %p43 = por %p41, %p42
      %p44 = scmp.ne.s32.totalorder %s30, %s31
      %p45 = scmp.eq.s32.totalorder %s23, 3
      %p46 = por %p44, %p45
      %p48 = scmp.ne.s32.totalorder %s31, %s47
      %p49 = scmp.eq.s32.totalorder %s23, 0
      %p50 = por %p48, %p49
      %s52 = sadd.s32 %s51, 1
      %p55 = scmp.eq.s32.totalorder %s17, 3
      %p56 = scmp.ne.s32.totalorder %s51, %s53
      %p57 = scmp.eq.s32.totalorder %s17, 0
      %p58 = por %p56, %p57
      %p59 = scmp.ne.s32.totalorder %s51, %s53
      %p60 = scmp.eq.s32.totalorder %s22, 3
      %p61 = por %p59, %p60
      %p62 = scmp.ne.s32.totalorder %s53, %s54
      %p63 = scmp.eq.s32.totalorder %s22, 0
      %p64 = por %p62, %p63
      %p65 = scmp.ne.s32.totalorder %s53, %s54
      %p66 = scmp.eq.s32.totalorder %s23, 3
      %p67 = por %p65, %p66
      %p69 = scmp.ne.s32.totalorder %s54, %s68
      %p70 = scmp.eq.s32.totalorder %s23, 0
      %p71 = por %p69, %p70
      %s72 = ssub.s32 %s17, %s24
      %p73 = scmp.eq.s32.totalorder %s72, 0
      %s75 = sadd.s32 %s74, 1
      %s76 = scalar_select %p73, %s74, %s75
      %p79 = pneg %p73
      %p80 = scmp.eq.s32.totalorder %s17, 3
      %p81 = por %p79, %p80
      %p82 = scmp.ne.s32.totalorder %s74, %s77
      %p83 = scmp.eq.s32.totalorder %s17, 0
      %p84 = por %p82, %p83
      %p85 = scmp.ne.s32.totalorder %s74, %s77
      %p86 = scmp.eq.s32.totalorder %s22, 3
      %p87 = por %p85, %p86
      %p88 = scmp.ne.s32.totalorder %s77, %s78
      %p89 = scmp.eq.s32.totalorder %s22, 0
      %p90 = por %p88, %p89
      %p91 = scmp.ne.s32.totalorder %s77, %s78
      %p92 = scmp.eq.s32.totalorder %s23, 3
      %p93 = por %p91, %p92
      %p95 = scmp.ne.s32.totalorder %s78, %s94
      %p96 = scmp.eq.s32.totalorder %s23, 0
      %p97 = por %p95, %p96
      %s98 = ssub.s32 %s17, %s24
      %p99 = scmp.eq.s32.totalorder %s98, 0
      %s101 = sadd.s32 %s100, 1
      %s102 = scalar_select %p99, %s100, %s101
      %p105 = pneg %p99
      %p106 = scmp.eq.s32.totalorder %s17, 3
      %p107 = por %p105, %p106
      %p108 = scmp.ne.s32.totalorder %s100, %s103
      %p109 = scmp.eq.s32.totalorder %s17, 0
      %p110 = por %p108, %p109
      %p111 = scmp.ne.s32.totalorder %s100, %s103
      %p112 = scmp.eq.s32.totalorder %s22, 3
      %p113 = por %p111, %p112
      %p114 = scmp.ne.s32.totalorder %s103, %s104
      %p115 = scmp.eq.s32.totalorder %s22, 0
      %p116 = por %p114, %p115
      %p117 = scmp.ne.s32.totalorder %s103, %s104
      %p118 = scmp.eq.s32.totalorder %s23, 3
      %p119 = por %p117, %p118
      %p121 = scmp.ne.s32.totalorder %s104, %s120
      %p122 = scmp.eq.s32.totalorder %s23, 0
      %p123 = por %p121, %p122
      %s124 = ssub.s32 %s17, %s24
      %p125 = scmp.eq.s32.totalorder %s124, 0
      %s127 = sadd.s32 %s126, 1
      %s128 = scalar_select %p125, %s126, %s127
      %p131 = pneg %p125
      %p132 = scmp.eq.s32.totalorder %s17, 3
      %p133 = por %p131, %p132
      %p134 = scmp.ne.s32.totalorder %s126, %s129
      %p135 = scmp.eq.s32.totalorder %s17, 0
      %p136 = por %p134, %p135
      %p137 = scmp.ne.s32.totalorder %s126, %s129
      %p138 = scmp.eq.s32.totalorder %s22, 3
      %p139 = por %p137, %p138
      %p140 = scmp.ne.s32.totalorder %s129, %s130
      %p141 = scmp.eq.s32.totalorder %s22, 0
      %p142 = por %p140, %p141
      %p143 = scmp.ne.s32.totalorder %s129, %s130
      %p144 = scmp.eq.s32.totalorder %s23, 3
      %p145 = por %p143, %p144
      %p147 = scmp.ne.s32.totalorder %s130, %s146
      %p148 = scmp.eq.s32.totalorder %s23, 0
      %p149 = por %p147, %p148
      %p150 = scmp.le.s32.totalorder 1, %s17
      %p151 = scmp.lt.s32.totalorder %s17, 5
      %p152 = pnand %p150, %p151
      %p153 = pneg %p152
      // Predicated region
      $region9: #{tpu_custom_call.1} parent=5 // pred_check
        _
      $region10: #{tpu_custom_call.1} parent=5 // pred_check_branch
        %155 = sbr.rel (%p152) target = $region12
      $region11: #{tpu_custom_call.1} parent=5 // pred_region
        %s156 = ssub.s32 %s17, 1
        // Predicated region
        $region13: #{tpu_custom_call.1} parent=11 // pred_check
          %p157 = pneg %p64
        $region14: #{tpu_custom_call.1} parent=11 // pred_check_branch
          %159 = sbr.rel (%p157) target = $region16
        $region15: #{tpu_custom_call.1} parent=11 // pred_region
          _
        $region16: #{tpu_custom_call.1} parent=11 // pred_fallthru
          _
      $region12: #{tpu_custom_call.1} parent=5 // pred_fallthru
        _
      %p160 = scmp.lt.s32.totalorder %s17, 4
      // Predicated region
      $region17: #{tpu_custom_call.1} parent=5 // pred_check
        %p161 = pneg %p160
      $region18: #{tpu_custom_call.1} parent=5 // pred_check_branch
        %163 = sbr.rel (%p161) target = $region20
      $region19: #{tpu_custom_call.1} parent=5 // pred_region
        // Predicated region
        $region21: #{tpu_custom_call.1} parent=19 // pred_check
          %p164 = pneg %p37
        $region22: #{tpu_custom_call.1} parent=19 // pred_check_branch
          %166 = sbr.rel (%p164) target = $region24
        $region23: #{tpu_custom_call.1} parent=19 // pred_region
          %s167 = smul.u32 16, %s17
          %p168 = scmp.lt.s32.totalorder %s167, 63
          %s169 = scalar_select %p168, %s167, 63
          %s170 = smul.addr %s169, 8
          %s171 = scalar_lea.vmem %s0, %s170
          %s172 = smul.u32 16, %s17
        $region24: #{tpu_custom_call.1} parent=19 // pred_fallthru
          _
      $region20: #{tpu_custom_call.1} parent=5 // pred_fallthru
        _
      %p173 = scmp.le.s32.totalorder 1, %s17
      %p174 = scmp.lt.s32.totalorder %s17, 5
      %p175 = pnand %p173, %p174
      %p176 = pneg %p175
      // Predicated region
      $region25: #{tpu_custom_call.1} parent=5 // pred_check
        _
      $region26: #{tpu_custom_call.1} parent=5 // pred_check_branch
        %178 = sbr.rel (%p175) target = $region28
      $region27: #{tpu_custom_call.1} parent=5 // pred_region
        %s179 = ssub.s32 %s17, 1
        %s180 = smul.u32 16, %s22
        %p181 = scmp.lt.s32.totalorder %s180, 63
        %s182 = scalar_select %p181, %s180, 63
        %s183 = smul.addr %s182, 8
        %s184 = scalar_lea.vmem %s0, %s183
        %p185 = pneg %p43
        %p186 = pneg %p40
        %p187 = pneg %p64
        %p188 = pneg %p61
        %p189 = pneg %p90
        %p190 = pneg %p87
        %s191 = smul.u32 16, %s22
        %p192 = scmp.lt.s32.totalorder %s191, 63
        %s193 = scalar_select %p192, %s191, 63
        %s194 = smul.addr %s193, 8
        %s195 = scalar_lea.vmem %s2, %s194
        %p196 = pneg %p116
        %p197 = pneg %p113
        %s198 = sand.u32 %s103, 1
        %s199 = scalar_lea.sflag [#allocation3], %s198
        %s200 = sand.u32 %s103, 1
        %s201 = scalar_lea.vmem [#allocation2], %s200
        %p202 = pneg %p142
        %p203 = pneg %p139
        %s204 = sand.u32 %s129, 1
        %s205 = scalar_lea.sflag [#allocation5], %s204
        %s206 = sand.u32 %s129, 1
        %s207 = scalar_lea.vmem [#allocation4], %s206
        %s208 = smul.u32 16, %s22
        %p209 = scmp.lt.s32.totalorder %s208, 63
        %s210 = scalar_select %p209, %s208, 63
        %s211 = smul.addr %s210, 8
        %s212 = scalar_lea.vmem %s0, %s211
        %s213 = smul.u32 16, %s22
        %s214 = smul.u32 16, %s22
        %p215 = scmp.lt.s32.totalorder %s214, 63
        %s216 = scalar_select %p215, %s214, 63
        %s217 = smul.addr %s216, 8
        %s218 = scalar_lea.vmem %s2, %s217
        %s219 = smul.u32 16, %s22
        %v220 = vld [vmem:[%s212] sm:$0xff]
        %v221 = vld [vmem:[%s212 + $0x8] sm:$0xff]
        %v222 = vld [vmem:[%s212 + $0x10] sm:$0xff]
        %v223 = vld [vmem:[%s212 + $0x18] sm:$0xff]
        %v224 = vld [vmem:[%s212 + $0x20] sm:$0xff]
        %v225 = vld [vmem:[%s212 + $0x28] sm:$0xff]
        %v226 = vld [vmem:[%s212 + $0x30] sm:$0xff]
        %v227 = vld [vmem:[%s212 + $0x38] sm:$0xff]
        %v228 = vld [vmem:[%s212 + $0x40] sm:$0xff]
        %v229 = vld [vmem:[%s212 + $0x48] sm:$0xff]
        %v230 = vld [vmem:[%s212 + $0x50] sm:$0xff]
        %v231 = vld [vmem:[%s212 + $0x58] sm:$0xff]
        %v232 = vld [vmem:[%s212 + $0x60] sm:$0xff]
        %v233 = vld [vmem:[%s212 + $0x68] sm:$0xff]
        %v234 = vld [vmem:[%s212 + $0x70] sm:$0xff]
        %v235 = vld [vmem:[%s212 + $0x78] sm:$0xff]
        %v236 = vld [vmem:[%s1] sm:$0xf]
        %vm237 = vcmask 31744
        %v239 = vsel %vm237, %v220, 0
        %v242 = vsel %vm237, %v221, 0
        %v245 = vsel %vm237, %v222, 0
        %v248 = vsel %vm237, %v223, 0
        %v251 = vsel %vm237, %v224, 0
        %v254 = vsel %vm237, %v225, 0
        %v257 = vsel %vm237, %v226, 0
        %v260 = vsel %vm237, %v227, 0
        %v263 = vsel %vm237, %v228, 0
        %v266 = vsel %vm237, %v229, 0
        %v269 = vsel %vm237, %v230, 0
        %v272 = vsel %vm237, %v231, 0
        %v275 = vsel %vm237, %v232, 0
        %v278 = vsel %vm237, %v233, 0
        %v281 = vsel %vm237, %v234, 0
        %v284 = vsel %vm237, %v235, 0
        %vm286 = vcmask 1043456
        %v288 = vsel %vm286, %v236, 0
        %290 = vmatpush.msra.mxu0 0.0
        %291 = vmatpush.msra.mxu0 0.0
        %292 = vmatpush.msra.mxu0 0.0
        %293 = vmatpush.msra.mxu0 0.0
        %294 = vmatpush.msra.mxu0 0.0
        %295 = vmatpush.msra.mxu0 0.0
        %296 = vmatpush.msra.mxu0 0.0
        %297 = vmatpush.msra.mxu0 0.0
        %298 = vmatpush.msra.mxu0 0.0
        %299 = vmatpush.msra.mxu0 0.0
        %300 = vmatpush.msra.mxu0 0.0
        %301 = vmatpush.msra.mxu0 0.0
        %302 = vmatpush.msra.mxu0 0.0
        %303 = vmatpush.msra.mxu0 0.0
        %304 = vmatpush.msra.mxu0 0.0
        %305 = vmatpush.msra.mxu0 %v288
        %306 = vmatmul.f32.gmra.mxu0 %v239
        %v307 = vpop.f32.mrf.mxu0
        %v308 = vadd.f32 0.0, %v307
        %309 = vmatmul.f32.gmra.mxu0 %v242
        %v310 = vpop.f32.mrf.mxu0
        %v311 = vadd.f32 0.0, %v310
        %312 = vmatmul.f32.gmra.mxu0 %v245
        %v313 = vpop.f32.mrf.mxu0
        %v314 = vadd.f32 0.0, %v313
        %315 = vmatmul.f32.gmra.mxu0 %v248
        %v316 = vpop.f32.mrf.mxu0
        %v317 = vadd.f32 0.0, %v316
        %318 = vmatmul.f32.gmra.mxu0 %v251
        %v319 = vpop.f32.mrf.mxu0
        %v320 = vadd.f32 0.0, %v319
        %321 = vmatmul.f32.gmra.mxu0 %v254
        %v322 = vpop.f32.mrf.mxu0
        %v323 = vadd.f32 0.0, %v322
        %324 = vmatmul.f32.gmra.mxu0 %v257
        %v325 = vpop.f32.mrf.mxu0
        %v326 = vadd.f32 0.0, %v325
        %327 = vmatmul.f32.gmra.mxu0 %v260
        %v328 = vpop.f32.mrf.mxu0
        %v329 = vadd.f32 0.0, %v328
        %330 = vmatmul.f32.gmra.mxu0 %v263
        %v331 = vpop.f32.mrf.mxu0
        %v332 = vadd.f32 0.0, %v331
        %333 = vmatmul.f32.gmra.mxu0 %v266
        %v334 = vpop.f32.mrf.mxu0
        %v335 = vadd.f32 0.0, %v334
        %336 = vmatmul.f32.gmra.mxu0 %v269
        %v337 = vpop.f32.mrf.mxu0
        %v338 = vadd.f32 0.0, %v337
        %339 = vmatmul.f32.gmra.mxu0 %v272
        %v340 = vpop.f32.mrf.mxu0
        %v341 = vadd.f32 0.0, %v340
        %342 = vmatmul.f32.gmra.mxu0 %v275
        %v343 = vpop.f32.mrf.mxu0
        %v344 = vadd.f32 0.0, %v343
        %345 = vmatmul.f32.gmra.mxu0 %v278
        %v346 = vpop.f32.mrf.mxu0
        %v347 = vadd.f32 0.0, %v346
        %348 = vmatmul.f32.gmra.mxu0 %v281
        %v349 = vpop.f32.mrf.mxu0
        %v350 = vadd.f32 0.0, %v349
        %351 = vmatmul.f32.gmra.mxu0 %v284
        %v352 = vpop.f32.mrf.mxu0
        %v353 = vadd.f32 0.0, %v352
        %354 = vdwg.mxu0
        %vm355 = vcmask 64512
        %356 = vst.msk [vmem:[%s218] sm:$0xff] %vm355, %v308
        %357 = vst.msk [vmem:[%s218 + $0x8] sm:$0xff] %vm355, %v311
        %358 = vst.msk [vmem:[%s218 + $0x10] sm:$0xff] %vm355, %v314
        %359 = vst.msk [vmem:[%s218 + $0x18] sm:$0xff] %vm355, %v317
        %360 = vst.msk [vmem:[%s218 + $0x20] sm:$0xff] %vm355, %v320
        %361 = vst.msk [vmem:[%s218 + $0x28] sm:$0xff] %vm355, %v323
        %362 = vst.msk [vmem:[%s218 + $0x30] sm:$0xff] %vm355, %v326
        %363 = vst.msk [vmem:[%s218 + $0x38] sm:$0xff] %vm355, %v329
        %364 = vst.msk [vmem:[%s218 + $0x40] sm:$0xff] %vm355, %v332
        %365 = vst.msk [vmem:[%s218 + $0x48] sm:$0xff] %vm355, %v335
        %366 = vst.msk [vmem:[%s218 + $0x50] sm:$0xff] %vm355, %v338
        %367 = vst.msk [vmem:[%s218 + $0x58] sm:$0xff] %vm355, %v341
        %368 = vst.msk [vmem:[%s218 + $0x60] sm:$0xff] %vm355, %v344
        %369 = vst.msk [vmem:[%s218 + $0x68] sm:$0xff] %vm355, %v347
        %370 = vst.msk [vmem:[%s218 + $0x70] sm:$0xff] %vm355, %v350
        %371 = vst.msk [vmem:[%s218 + $0x78] sm:$0xff] %vm355, %v353
        %v372 = vsel %vm355, %v308, 0.0
        %v373 = vsel %vm355, %v311, 0.0
        %v374 = vadd.f32 %v372, %v373
        %v375 = vsel %vm355, %v314, 0.0
        %v376 = vadd.f32 %v374, %v375
        %v377 = vsel %vm355, %v317, 0.0
        %v378 = vadd.f32 %v376, %v377
        %v379 = vsel %vm355, %v320, 0.0
        %v380 = vadd.f32 %v378, %v379
        %v381 = vsel %vm355, %v323, 0.0
        %v382 = vadd.f32 %v380, %v381
        %v383 = vsel %vm355, %v326, 0.0
        %v384 = vadd.f32 %v382, %v383
        %v385 = vsel %vm355, %v329, 0.0
        %v386 = vadd.f32 %v384, %v385
        %v387 = vsel %vm355, %v332, 0.0
        %v388 = vadd.f32 %v386, %v387
        %v389 = vsel %vm355, %v335, 0.0
        %v390 = vadd.f32 %v388, %v389
        %v391 = vsel %vm355, %v338, 0.0
        %v392 = vadd.f32 %v390, %v391
        %v393 = vsel %vm355, %v341, 0.0
        %v394 = vadd.f32 %v392, %v393
        %v395 = vsel %vm355, %v344, 0.0
        %v396 = vadd.f32 %v394, %v395
        %v397 = vsel %vm355, %v347, 0.0
        %v398 = vadd.f32 %v396, %v397
        %v399 = vsel %vm355, %v350, 0.0
        %v400 = vadd.f32 %v398, %v399
        %v401 = vsel %vm355, %v353, 0.0
        %v402 = vadd.f32 %v400, %v401
        %v403 = vrot.slane %v402, 4
        %v404 = vadd.f32 %v402, %v403
        %v405 = vrot.slane %v404, 2
        %v406 = vadd.f32 %v404, %v405
        %v407 = vrot.slane %v406, 1
        %v408 = vadd.f32 %v406, %v407
        %vm409 = vcmask 57344
        %410 = vst.msk [vmem:[%s201] sm:$0x1] %vm409, %v408
        %v411 = vmul.f32 %v308, %v308
        %v412 = vmul.f32 %v311, %v311
        %v413 = vmul.f32 %v314, %v314
        %v414 = vmul.f32 %v317, %v317
        %v415 = vmul.f32 %v320, %v320
        %v416 = vmul.f32 %v323, %v323
        %v417 = vmul.f32 %v326, %v326
        %v418 = vmul.f32 %v329, %v329
        %v419 = vmul.f32 %v332, %v332
        %v420 = vmul.f32 %v335, %v335
        %v421 = vmul.f32 %v338, %v338
        %v422 = vmul.f32 %v341, %v341
        %v423 = vmul.f32 %v344, %v344
        %v424 = vmul.f32 %v347, %v347
        %v425 = vmul.f32 %v350, %v350
        %v426 = vmul.f32 %v353, %v353
        %v427 = vsel %vm355, %v411, 0.0
        %v428 = vsel %vm355, %v412, 0.0
        %v429 = vadd.f32 %v427, %v428
        %v430 = vsel %vm355, %v413, 0.0
        %v431 = vadd.f32 %v429, %v430
        %v432 = vsel %vm355, %v414, 0.0
        %v433 = vadd.f32 %v431, %v432
        %v434 = vsel %vm355, %v415, 0.0
        %v435 = vadd.f32 %v433, %v434
        %v436 = vsel %vm355, %v416, 0.0
        %v437 = vadd.f32 %v435, %v436
        %v438 = vsel %vm355, %v417, 0.0
        %v439 = vadd.f32 %v437, %v438
        %v440 = vsel %vm355, %v418, 0.0
        %v441 = vadd.f32 %v439, %v440
        %v442 = vsel %vm355, %v419, 0.0
        %v443 = vadd.f32 %v441, %v442
        %v444 = vsel %vm355, %v420, 0.0
        %v445 = vadd.f32 %v443, %v444
        %v446 = vsel %vm355, %v421, 0.0
        %v447 = vadd.f32 %v445, %v446
        %v448 = vsel %vm355, %v422, 0.0
        %v449 = vadd.f32 %v447, %v448
        %v450 = vsel %vm355, %v423, 0.0
        %v451 = vadd.f32 %v449, %v450
        %v452 = vsel %vm355, %v424, 0.0
        %v453 = vadd.f32 %v451, %v452
        %v454 = vsel %vm355, %v425, 0.0
        %v455 = vadd.f32 %v453, %v454
        %v456 = vsel %vm355, %v426, 0.0
        %v457 = vadd.f32 %v455, %v456
        %v458 = vrot.slane %v457, 4
        %v459 = vadd.f32 %v457, %v458
        %v460 = vrot.slane %v459, 2
        %v461 = vadd.f32 %v459, %v460
        %v462 = vrot.slane %v461, 1
        %v463 = vadd.f32 %v461, %v462
        %464 = vst.msk [vmem:[%s207] sm:$0x1] %vm409, %v463
        %s465 = smul.u32 16, %s22
        %p466 = scmp.lt.s32.totalorder %s465, 63
        %s467 = scalar_select %p466, %s465, 63
        %s468 = smul.addr %s467, 8
        %s469 = scalar_lea.vmem %s2, %s468
        %s470 = sand.u32 %s103, 1
        %s471 = scalar_lea.sflag [#allocation3], %s470
        %s472 = sand.u32 %s103, 1
        %s473 = scalar_lea.vmem [#allocation2], %s472
        %s474 = sand.u32 %s129, 1
        %s475 = scalar_lea.sflag [#allocation5], %s474
        %s476 = sand.u32 %s129, 1
        %s477 = scalar_lea.vmem [#allocation4], %s476
        // Predicated region
        $region29: #{tpu_custom_call.1} parent=27 // pred_check
          %p478 = pneg %p87
        $region30: #{tpu_custom_call.1} parent=27 // pred_check_branch
          %480 = sbr.rel (%p478) target = $region32
        $region31: #{tpu_custom_call.1} parent=27 // pred_region
          %s481 = smul.u32 16, %s22
        $region32: #{tpu_custom_call.1} parent=27 // pred_fallthru
          _
        // Predicated region
        $region33: #{tpu_custom_call.1} parent=27 // pred_check
          %p482 = pneg %p113
        $region34: #{tpu_custom_call.1} parent=27 // pred_check_branch
          %484 = sbr.rel (%p482) target = $region36
        $region35: #{tpu_custom_call.1} parent=27 // pred_region
          %486 = vsyncadd %s471, 0
          %s487 = scalar_lea.hbm %s3, %s22
          %s489 = sshll.u32 %s473, 4
          %s490 = int_to_ptr.vmem [resolvable:$true] %s489
          %s491 = sshll.u32 %s487, 4
          %s492 = int_to_ptr.hbm [resolvable:$true] %s491
          %494 = dma.vmem_to_hbm [thread:$0]  %s490, 16, %s492, %s471
        $region36: #{tpu_custom_call.1} parent=27 // pred_fallthru
          _
        // Predicated region
        $region37: #{tpu_custom_call.1} parent=27 // pred_check
          %p495 = pneg %p139
        $region38: #{tpu_custom_call.1} parent=27 // pred_check_branch
          %497 = sbr.rel (%p495) target = $region40
        $region39: #{tpu_custom_call.1} parent=27 // pred_region
          %499 = vsyncadd %s475, 0
          %s500 = scalar_lea.hbm %s4, %s22
          %s502 = sshll.u32 %s477, 4
          %s503 = int_to_ptr.vmem [resolvable:$true] %s502
          %s504 = sshll.u32 %s500, 4
          %s505 = int_to_ptr.hbm [resolvable:$true] %s504
          %507 = dma.vmem_to_hbm [thread:$0]  %s503, 16, %s505, %s475
        $region40: #{tpu_custom_call.1} parent=27 // pred_fallthru
          _
      $region28: #{tpu_custom_call.1} parent=5 // pred_fallthru
        _
      %p508 = scmp.le.s32.totalorder 2, %s17
      // Predicated region
      $region41: #{tpu_custom_call.1} parent=5 // pred_check
        %p509 = pneg %p508
      $region42: #{tpu_custom_call.1} parent=5 // pred_check_branch
        %511 = sbr.rel (%p509) target = $region44
      $region43: #{tpu_custom_call.1} parent=5 // pred_region
        %s512 = ssub.s32 %s17, 2
        // Predicated region
        $region45: #{tpu_custom_call.1} parent=43 // pred_check
          %p513 = pneg %p93
        $region46: #{tpu_custom_call.1} parent=43 // pred_check_branch
          %515 = sbr.rel (%p513) target = $region48
        $region47: #{tpu_custom_call.1} parent=43 // pred_region
          %s516 = smul.u32 16, %s23
          %p517 = scmp.lt.s32.totalorder %s516, 63
          %s518 = scalar_select %p517, %s516, 63
          %s519 = smul.addr %s518, 8
          %s520 = scalar_lea.vmem %s2, %s519
        $region48: #{tpu_custom_call.1} parent=43 // pred_fallthru
          _
        // Predicated region
        $region49: #{tpu_custom_call.1} parent=43 // pred_check
          %p521 = pneg %p119
        $region50: #{tpu_custom_call.1} parent=43 // pred_check_branch
          %523 = sbr.rel (%p521) target = $region52
        $region51: #{tpu_custom_call.1} parent=43 // pred_region
          %s524 = sand.u32 %s104, 1
          %s525 = scalar_lea.sflag [#allocation3], %s524
          %s526 = sand.u32 %s104, 1
          %s527 = scalar_lea.vmem [#allocation2], %s526
          %529 = dma.done %s525, 16
        $region52: #{tpu_custom_call.1} parent=43 // pred_fallthru
          _
        // Predicated region
        $region53: #{tpu_custom_call.1} parent=43 // pred_check
          %p530 = pneg %p145
        $region54: #{tpu_custom_call.1} parent=43 // pred_check_branch
          %532 = sbr.rel (%p530) target = $region56
        $region55: #{tpu_custom_call.1} parent=43 // pred_region
          %s533 = sand.u32 %s130, 1
          %s534 = scalar_lea.sflag [#allocation5], %s533
          %s535 = sand.u32 %s130, 1
          %s536 = scalar_lea.vmem [#allocation4], %s535
          %538 = dma.done %s534, 16
        $region56: #{tpu_custom_call.1} parent=43 // pred_fallthru
          _
      $region44: #{tpu_custom_call.1} parent=5 // pred_fallthru
        _
    $region6: #{tpu_custom_call.1} parent=1 // loop_footer
      %s21 = sadd.s32 1, %s17
    $region7: #{tpu_custom_call.1} parent=1 // loop_footer_branch
      %16 = sbr.rel target = $region3
    $region8: #{tpu_custom_call.1} parent=1 // loop_exit
      _
    %539 = vsyncpa [#allocation3], 1
    %s540 = scalar_lea.sflag [#allocation3], 1
    %541 = vsyncpa %s540, 1
    %542 = vsyncpa [#allocation5], 1
    %s543 = scalar_lea.sflag [#allocation5], 1
    %544 = vsyncpa %s543, 1

</llo_original>
